<compile_context>
chip_gen: v6e
topology: v6e:2x2x1
jax: 0.10.0
libtpu: 0.0.40
codegen_flags: <defaults>
</compile_context>

<pallas_src>
import jax
import jax.numpy as jnp
from jax.experimental import pallas as pl
from jax.experimental.pallas import tpu as pltpu


def _passthrough_kernel(w_ref, x_ref, o_ref):
    # w_ref: SMEM (1,) scalar parameter; x_ref/o_ref: VMEM (tile_rows, lanes).
    w = w_ref[0]
    o_ref[...] = (x_ref[...] + w * 0.0).astype(o_ref.dtype)


def _sublane_multiple(dtype):
    itemsize = jnp.dtype(dtype).itemsize
    return {4: 8, 2: 16, 1: 32}.get(itemsize, 8)


def _choose_lanes(n):
    for lanes in (512, 256, 128):
        if n % lanes == 0:
            return lanes
    return None


def _choose_tile_rows(rows, sublane, elem_bytes, lanes):
    """~4 MiB tiles (double-buffered in+out stays well under v7x's scoped
    VMEM), rounded to the dtype's sublane multiple; shrink so the grid has at
    least 2 steps where possible (both v7x TensorCores participate)."""
    if rows <= sublane:
        return rows  # single block; block shape equals full array dims
    target_bytes = 4 * 1024 * 1024
    tile = target_bytes // (lanes * elem_bytes)
    tile = max(sublane, (tile // sublane) * sublane)
    if tile >= rows:
        half = -(-rows // 2)                      # ceil(rows / 2)
        half = -(-half // sublane) * sublane      # round up to sublane
        tile = half if half < rows else rows
    return tile


def single_point_pass_through(batch, w):
    """JAX/Pallas equivalent of SinglePointPassThrough.forward.

    batch: dict with key 'empirical' -> array of any shape
    w:     float32 array of shape (1,)  (the nn.Parameter)
    """
    x = batch["empirical"]
    orig_shape = x.shape
    n = x.size

    if n == 0:
        return {"single": x}

    lanes = _choose_lanes(n)
    if lanes is None:
        # Ragged size: a single fused XLA elementwise op is already at the
        # HBM roofline for this pure pass-through; no layout plumbing needed.
        return {"single": (x + (w * 0.0).astype(x.dtype)[0]).astype(x.dtype)}

    elem_bytes = jnp.dtype(x.dtype).itemsize
    sublane = _sublane_multiple(x.dtype)

    rows = n // lanes
    x2d = x.reshape(rows, lanes)          # pure reshape, no copy / no pad
    tile_rows = _choose_tile_rows(rows, sublane, elem_bytes, lanes)
    grid = (pl.cdiv(rows, tile_rows),)    # ragged final block is masked

    out2d = pl.pallas_call(
        _passthrough_kernel,
        out_shape=jax.ShapeDtypeStruct(x2d.shape, x2d.dtype),
        grid=grid,
        in_specs=[
            pl.BlockSpec(memory_space=pltpu.MemorySpace.SMEM),     # w scalar
            pl.BlockSpec((tile_rows, lanes), lambda i: (i, 0)),    # data tile
        ],
        out_specs=pl.BlockSpec((tile_rows, lanes), lambda i: (i, 0)),
        compiler_params=pltpu.CompilerParams(
            dimension_semantics=("parallel",),
        ),
    )(w, x2d)

    return {"single": out2d.reshape(orig_shape)}


if __name__ == "__main__":
    key = jax.random.PRNGKey(0)
    # Small shape consistent with a generic 'empirical' batch tensor.
    x = jax.random.normal(key, (2, 4, 16, 16), dtype=jnp.float32)
    # Parameter init matches torch.zeros(1) in the module __init__.
    w = jnp.zeros((1,), dtype=jnp.float32)

    batch = {"empirical": x}
    out = single_point_pass_through(batch, w)
    jax.block_until_ready(out["single"])

    # Semantics check: output must equal input exactly (w * 0.0 == 0).
    assert out["single"].shape == x.shape
    assert out["single"].dtype == x.dtype
    assert bool(jnp.all(out["single"] == x))

    # Also exercise a ragged-size fallback path for coverage.
    x2 = jax.random.normal(key, (3, 5, 7), dtype=jnp.float32)
    out2 = single_point_pass_through({"empirical": x2}, w)
    jax.block_until_ready(out2["single"])
    assert bool(jnp.all(out2["single"] == x2))

    print("KERNEL_OK")
</pallas_src>

<mosaic_0001>
module attributes {stable_mosaic.version = 11 : i64} {
  func.func @_passthrough_kernel(%arg0: i32, %arg1: memref<1xf32, #tpu.memory_space<smem>>, %arg2: memref<4x512xf32, #tpu.memory_space<vmem>>, %arg3: memref<4x512xf32, #tpu.memory_space<vmem>>) attributes {dimension_semantics = [#tpu.dimension_semantics<parallel>], iteration_bounds = array<i64: 1>, scalar_prefetch = 0 : i64, scratch_operands = 0 : i64, tpu.core_type = #tpu.core_type<tc>, window_params = [{transform_indices = @transform_0, window_bounds = array<i64: 1>}, {transform_indices = @transform_1, window_bounds = array<i64: 4, 512>}, {transform_indices = @transform_2, window_bounds = array<i64: 4, 512>}]} {
    %c0 = arith.constant 0 : index
    %0 = memref.load %arg1[%c0] : memref<1xf32, #tpu.memory_space<smem>>
    %c0_0 = arith.constant 0 : index
    %c0_1 = arith.constant 0 : index
    %1 = vector.load %arg2[%c0_0, %c0_1] : memref<4x512xf32, #tpu.memory_space<vmem>>, vector<4x512xf32>
    %cst = arith.constant 0.000000e+00 : f32
    %2 = arith.mulf %0, %cst : f32
    %3 = vector.broadcast %2 : f32 to vector<4x512xf32>
    %4 = arith.addf %1, %3 : vector<4x512xf32>
    %c0_2 = arith.constant 0 : index
    %c0_3 = arith.constant 0 : index
    %5 = vector.load %arg3[%c0_2, %c0_3] : memref<4x512xf32, #tpu.memory_space<vmem>>, vector<4x512xf32>
    tpu.vector_store %arg3[%c0_2, %c0_3], %4 {strides = array<i32>} : memref<4x512xf32, #tpu.memory_space<vmem>>, vector<4x512xf32>,
    return
  }
  func.func @transform_0(%arg0: i32) -> i32 {
    %c0_i32 = arith.constant 0 : i32
    %c0_i32_0 = arith.constant 0 : i32
    return %c0_i32 : i32
  }
  func.func @transform_1(%arg0: i32) -> (i32, i32) {
    %c0_i32 = arith.constant 0 : i32
    %c0_i32_0 = arith.constant 0 : i32
    return %arg0, %c0_i32 : i32, i32
  }
  func.func @transform_2(%arg0: i32) -> (i32, i32) {
    %c0_i32 = arith.constant 0 : i32
    %c0_i32_0 = arith.constant 0 : i32
    return %arg0, %c0_i32 : i32, i32
  }
}

</mosaic_0001>

<llo_original>
// kernel: tpu_custom_call.1
$region0: #{tpu_custom_call.1}
  #allocation0 [shape = 'u32[]', space=smem, size = 0x4, offset = 0x4, fixed_abs, tag = 'smem constant byte address 0x4 - core index']
  #allocation1 [shape = 'u32[144,128]{1,0:T(1,128)}', space=vmem, size = 0x12000, scoped, tag = 'internal scratch']
  #allocation2 [shape = 'f32[1]{0:T(128)S(6)}', space=smem, size = 0x200, scoped, tag = 'scoped memory for tpu_custom_call.1']
  %s0 = inlined_call_operand.<no memory space> [shape: f32[1], index: 0, kind: input, shape index: {}]
  %s1 = inlined_call_operand.hbm [shape: f32[4,512], index: 1, kind: input, shape index: {}]
  %s2 = inlined_call_operand.hbm [shape: f32[4,512], index: 2, kind: output, shape index: {}]
  %s3 = sld [smem:[#allocation0]]
  $region22: #{tpu_custom_call.1} parent=0
    _
  %s5 = ssub.s32 1, %s3
  %s6 = scalar_select 0, %s5, %s3
  %7 = sst [smem:[#allocation2]] %s0
  $region1: #{tpu_custom_call.1} parent=0
    #allocation3 [shape = 'u8[8192]{0}', space=vmem, size = 0x2000, scoped, tag = 'input window, operand 1, single buffered']
    #allocation4 [shape = 's32[1]{0}', space=sflag, size = 0x4, scoped, tag = 'scoped memory for tpu_custom_call.1']
    #allocation5 [shape = 's32[1]{0}', space=sflag, size = 0x4, scoped, tag = 'scoped memory for tpu_custom_call.1']
    #allocation6 [shape = 'u8[8192]{0}', space=vmem, size = 0x2000, scoped, tag = 'output window, operand 0, single buffered']
    %8 = vsyncpa [#allocation4], 0
    %9 = vsyncpa [#allocation5], 0
    // Predicated region
    $region2: #{tpu_custom_call.1} parent=1 // pred_check
      _
    $region3: #{tpu_custom_call.1} parent=1 // pred_check_branch
      %11 = sbr.rel (0) target = $region5
    $region4: #{tpu_custom_call.1} parent=1 // pred_region
      _
    $region5: #{tpu_custom_call.1} parent=1 // pred_fallthru
      _
    // Predicated region
    $region6: #{tpu_custom_call.1} parent=1 // pred_check
      _
    $region7: #{tpu_custom_call.1} parent=1 // pred_check_branch
      %13 = sbr.rel (0) target = $region9
    $region8: #{tpu_custom_call.1} parent=1 // pred_region
      %s15 = ssub.s32 256, 256
      %16 = vsyncadd [#allocation4], %s15
      %s18 = sshll.u32 [#allocation3], 4
      %s19 = int_to_ptr.vmem [resolvable:$true] %s18
      %21 = dma.hbm_to_vmem [thread:$0]  %s1, 256, %s19, [#allocation4]
    $region9: #{tpu_custom_call.1} parent=1 // pred_fallthru
      _
    // Predicated region
    $region10: #{tpu_custom_call.1} parent=1 // pred_check
      _
    $region11: #{tpu_custom_call.1} parent=1 // pred_check_branch
      %23 = sbr.rel (0) target = $region13
    $region12: #{tpu_custom_call.1} parent=1 // pred_region
      %24 = dma.done [#allocation4], 256
    $region13: #{tpu_custom_call.1} parent=1 // pred_fallthru
      _
    %s25 = sld [smem:[#allocation2]]
    %v26 = vld [vmem:[#allocation3] sm:$0xff]
    %v27 = vld [vmem:[#allocation3 + $0x8] sm:$0xff]
    %s28 = smul.f32 %s25, 0.0
    %v29 = vstv %s28
    %v30 = vadd.f32 %v26, %v29
    %v31 = vadd.f32 %v27, %v29
    %32 = vst [vmem:[#allocation6] sm:$0xff] %v30
    %33 = vst [vmem:[#allocation6 + $0x8] sm:$0xff] %v31
    // Predicated region
    $region14: #{tpu_custom_call.1} parent=1 // pred_check
      _
    $region15: #{tpu_custom_call.1} parent=1 // pred_check_branch
      %35 = sbr.rel (0) target = $region17
    $region16: #{tpu_custom_call.1} parent=1 // pred_region
      %s37 = ssub.s32 256, 256
      %38 = vsyncadd [#allocation5], %s37
      %s40 = sshll.u32 [#allocation6], 4
      %s41 = int_to_ptr.vmem [resolvable:$true] %s40
      %43 = dma.vmem_to_hbm [thread:$0]  %s41, 256, %s2, [#allocation5]
    $region17: #{tpu_custom_call.1} parent=1 // pred_fallthru
      _
    // Predicated region
    $region18: #{tpu_custom_call.1} parent=1 // pred_check
      _
    $region19: #{tpu_custom_call.1} parent=1 // pred_check_branch
      %45 = sbr.rel (0) target = $region21
    $region20: #{tpu_custom_call.1} parent=1 // pred_region
      %46 = dma.done [#allocation5], 256
    $region21: #{tpu_custom_call.1} parent=1 // pred_fallthru
      _
    %47 = vsyncpa [#allocation4], 1
    %48 = vsyncpa [#allocation5], 1

</llo_original>
